<compile_context>
chip_gen: v7x
topology: tpu7x:2x2x1
jax: 0.10.0
libtpu: 0.0.40
codegen_flags: <defaults>
</compile_context>

<pallas_src>
import functools

import jax
import jax.numpy as jnp
from jax.experimental import pallas as pl
from jax.experimental.pallas import tpu as pltpu

KSIZE = 5
PAD = 2
DILATION = 1
STRIDE = 1
LANE = 128

_MAX_UNROLL = 16                 # static-unroll cap for the in-kernel batch loop
_VMEM_BUDGET_BYTES = 20 * 2**20  # per-step working-set budget (v7x-safe)


def _conv1d_relu_kernel(x_ref, w_ref, b_ref, o_ref, col_ref, *,
                        b_tile, c_in_p, l_pad):
    # x_ref:   (b_tile, c_in_p, l_pad)        input batch group
    # w_ref:   (C_out, KSIZE*c_in_p)          tap-major weight (VMEM-resident)
    # b_ref:   (C_out, 1)                     bias column (f32)
    # o_ref:   (b_tile, C_out, l_pad)         output batch group
    # col_ref: (KSIZE*c_in_p, b_tile*l_pad)   im2col scratch, batch on lanes

    # Hoisted tap validity masks: tap k at position l reads x[l + k - PAD], valid
    # iff 0 <= l + k - PAD < l_pad.  Computed once per grid step (not per sample).
    lane = jax.lax.broadcasted_iota(jnp.int32, (c_in_p, l_pad), 1)
    masks = []
    for k in range(KSIZE):
        lo = PAD - k
        hi = l_pad + PAD - k
        if lo > 0 or hi < l_pad:
            masks.append((lane >= lo) & (lane < hi))
        else:
            masks.append(None)

    # Build the im2col tile for the whole batch group.  Rows are (k, ci)
    # tap-major (matching w_ref columns); lanes are (b, l) batch-major.  Every
    # store offset is 8-sublane / 128-lane aligned, and each tap is written to
    # VMEM immediately so vreg live ranges stay short under the static unroll.
    for b in range(b_tile):
        x_b = x_ref[b]                                        # (c_in_p, l_pad)
        for k in range(KSIZE):
            shift = (PAD - k) % l_pad
            tap = pltpu.roll(x_b, shift, axis=1) if shift else x_b
            if masks[k] is not None:
                tap = jnp.where(masks[k], tap, 0.0)
            col_ref[k * c_in_p:(k + 1) * c_in_p,
                    b * l_pad:(b + 1) * l_pad] = tap

    # One wide MXU matmul over the whole batch group; bias + ReLU on the VPU.
    acc = jnp.dot(w_ref[...], col_ref[...], preferred_element_type=jnp.float32)
    acc = jnp.maximum(acc + b_ref[...], 0.0).astype(o_ref.dtype)

    # Lane-aligned writeback, one (C_out, l_pad) slab per sample.
    for b in range(b_tile):
        o_ref[b] = acc[:, b * l_pad:(b + 1) * l_pad]


def _largest_divisor_leq(n, cap):
    best = 1
    for d in range(1, max(1, cap) + 1):
        if n % d == 0:
            best = d
    return best


def _choose_b_tile(n_batch, c_in_p, c_out, l_pad, itemsize=4):
    # Double-buffered in/out blocks plus the im2col scratch, per batch element.
    per_b = (2 * (c_in_p + c_out) + KSIZE * c_in_p) * l_pad * itemsize
    cap = max(1, _VMEM_BUDGET_BYTES // per_b)
    cap = min(cap, _MAX_UNROLL)
    if n_batch >= 2:
        # Keep >= 2 grid steps: lets BlockSpec double-buffering overlap DMA with
        # compute, and keeps both TensorCores busy on v7x's "parallel" axis.
        cap = min(cap, n_batch // 2)
    cap = min(cap, n_batch)
    return _largest_divisor_leq(n_batch, cap)


def block_forward(x, weight, bias, *, b_tile=None, cast_to=None):
    """Conv1d(k=5, pad=2, dil=1, stride=1) + ReLU.

    x: (N, C_in, L); weight: (C_out, C_in, 5); bias: (C_out,).
    Returns (N, C_out, L_out) in x.dtype.  `cast_to=jnp.bfloat16` halves
    input/weight HBM traffic on v6e/v7x (f32 accumulation is kept).
    """
    N, C_in, L = x.shape
    C_out, c_in_w, ksz = weight.shape
    assert ksz == KSIZE and c_in_w == C_in
    L_out = (L + 2 * PAD - DILATION * (KSIZE - 1) - 1) // STRIDE + 1
    out_dtype = x.dtype

    # Sublane-align channels; lane-align length (tail zeros coincide with the
    # conv's own zero padding, so the math is exact; the tail is sliced off).
    c_in_p = ((C_in + 7) // 8) * 8
    l_pad = ((max(L, LANE) + LANE - 1) // LANE) * LANE
    pad_c, pad_l = c_in_p - C_in, l_pad - L
    if pad_c or pad_l:
        # TODO(synk): for large non-128-aligned L this is an extra HBM pass; a
        # masked ragged last tile in-kernel would avoid it.
        x = jnp.pad(x, ((0, 0), (0, pad_c), (0, pad_l)))

    # Weight laid out so its column index is k * c_in_p + ci (tap-major),
    # matching the im2col rows; padded channels get zero weights.
    w2 = jnp.transpose(weight, (0, 2, 1))                  # (C_out, K, C_in)
    if pad_c:
        w2 = jnp.pad(w2, ((0, 0), (0, 0), (0, pad_c)))
    w2 = w2.reshape(C_out, KSIZE * c_in_p)
    b_col = bias.astype(jnp.float32).reshape(C_out, 1)

    if cast_to is not None:                                # e.g. bf16 on v6e/v7x
        x = x.astype(cast_to)
        w2 = w2.astype(cast_to)
    in_dt = x.dtype

    if b_tile is None:
        b_tile = _choose_b_tile(N, c_in_p, C_out, l_pad, itemsize=4)
    if N % b_tile != 0:
        raise ValueError(f"b_tile={b_tile} must divide the batch size N={N}")

    grid = N // b_tile
    width = b_tile * l_pad

    # VMEM footprint: double-buffered in/out blocks + im2col scratch + weights.
    vmem_need = (2 * b_tile * c_in_p * l_pad * in_dt.itemsize
                 + 2 * b_tile * C_out * l_pad * jnp.dtype(out_dtype).itemsize
                 + KSIZE * c_in_p * width * in_dt.itemsize
                 + 2 * C_out * KSIZE * c_in_p * in_dt.itemsize
                 + (1 << 20))
    vmem_limit = int(min(48 * 2**20, max(32 * 2**20, 2 * vmem_need)))

    kernel = functools.partial(_conv1d_relu_kernel,
                               b_tile=b_tile, c_in_p=c_in_p, l_pad=l_pad)

    out = pl.pallas_call(
        kernel,
        out_shape=jax.ShapeDtypeStruct((N, C_out, l_pad), out_dtype),
        grid_spec=pltpu.PrefetchScalarGridSpec(
            num_scalar_prefetch=0,
            grid=(grid,),
            in_specs=[
                pl.BlockSpec((b_tile, c_in_p, l_pad), lambda n: (n, 0, 0)),
                pl.BlockSpec((C_out, KSIZE * c_in_p), lambda n: (0, 0)),
                pl.BlockSpec((C_out, 1), lambda n: (0, 0)),
            ],
            out_specs=pl.BlockSpec((b_tile, C_out, l_pad), lambda n: (n, 0, 0)),
            scratch_shapes=[pltpu.VMEM((KSIZE * c_in_p, width), in_dt)],
        ),
        compiler_params=pltpu.CompilerParams(
            dimension_semantics=("parallel",),
            vmem_limit_bytes=vmem_limit),
    )(x, w2, b_col)

    if l_pad != L_out:
        out = out[:, :, :L_out]
    return out


def reference_forward(x, weight, bias):
    # Pure-JAX reference (NCL conv + ReLU) for validation.
    out = jax.lax.conv_general_dilated(
        x, weight,
        window_strides=(STRIDE,),
        padding=[(PAD, PAD)],
        rhs_dilation=(DILATION,),
        dimension_numbers=("NCH", "OIH", "NCH"),
    )
    return jax.nn.relu(out + bias.reshape(1, -1, 1))


def _run_case(key, N, C_in, C_out, L):
    k_x, k_w, k_b = jax.random.split(key, 3)
    x = jax.random.normal(k_x, (N, C_in, L), dtype=jnp.float32)
    # Deterministic PyTorch-like init: U(-bound, bound), bound = 1/sqrt(C_in*KSIZE)
    bound = 1.0 / (C_in * KSIZE) ** 0.5
    weight = jax.random.uniform(k_w, (C_out, C_in, KSIZE), jnp.float32, -bound, bound)
    bias = jax.random.uniform(k_b, (C_out,), jnp.float32, -bound, bound)

    out = jax.block_until_ready(block_forward(x, weight, bias))
    ref = reference_forward(x, weight, bias)
    assert out.shape == ref.shape, (out.shape, ref.shape)
    assert jnp.allclose(out, ref, atol=1e-5, rtol=1e-5), (
        f"mismatch vs reference at N={N} C_in={C_in} C_out={C_out} L={L}")


if __name__ == "__main__":
    key = jax.random.PRNGKey(0)
    k0, k1 = jax.random.split(key)
    # Main case (lane-aligned L, batch-tiled grid of 2).
    _run_case(k0, N=2, C_in=4, C_out=8, L=256)
    # Ragged case: non-128-aligned L and non-8-aligned C_in exercise the
    # roll/mask halo and the channel padding (locks in the roll sign convention).
    _run_case(k1, N=4, C_in=3, C_out=8, L=100)
    print("KERNEL_OK")
</pallas_src>

<mosaic_0001>
module attributes {stable_mosaic.version = 11 : i64} {
  func.func @_conv1d_relu_kernel(%arg0: i32, %arg1: memref<1x8x256xf32, #tpu.memory_space<vmem>>, %arg2: memref<8x40xf32, #tpu.memory_space<vmem>>, %arg3: memref<8x1xf32, #tpu.memory_space<vmem>>, %arg4: memref<1x8x256xf32, #tpu.memory_space<vmem>>, %arg5: memref<40x256xf32, #tpu.memory_space<vmem>>) attributes {dimension_semantics = [#tpu.dimension_semantics<parallel>], iteration_bounds = array<i64: 2>, scalar_prefetch = 0 : i64, scratch_operands = 1 : i64, tpu.core_type = #tpu.core_type<tc>, window_params = [{transform_indices = @transform_0, window_bounds = array<i64: 1, 8, 256>}, {pipeline_mode = #tpu.pipeline_mode<synchronous>, transform_indices = @transform_1, window_bounds = array<i64: 8, 40>}, {pipeline_mode = #tpu.pipeline_mode<synchronous>, transform_indices = @transform_2, window_bounds = array<i64: 8, 1>}, {transform_indices = @transform_3, window_bounds = array<i64: 1, 8, 256>}]} {
    %0 = tpu.iota {dimensions = array<i32: 1>} : vector<8x256xi32>
    %c2_i32 = arith.constant 2 : i32
    %1 = vector.broadcast %c2_i32 : i32 to vector<8x256xi32>
    %2 = arith.cmpi sge, %0, %1 : vector<8x256xi32>
    %c258_i32 = arith.constant 258 : i32
    %3 = vector.broadcast %c258_i32 : i32 to vector<8x256xi32>
    %4 = arith.cmpi slt, %0, %3 : vector<8x256xi32>
    %5 = arith.andi %2, %4 : vector<8x256xi1>
    %c1_i32 = arith.constant 1 : i32
    %6 = vector.broadcast %c1_i32 : i32 to vector<8x256xi32>
    %7 = arith.cmpi sge, %0, %6 : vector<8x256xi32>
    %c257_i32 = arith.constant 257 : i32
    %8 = vector.broadcast %c257_i32 : i32 to vector<8x256xi32>
    %9 = arith.cmpi slt, %0, %8 : vector<8x256xi32>
    %10 = arith.andi %7, %9 : vector<8x256xi1>
    %c-1_i32 = arith.constant -1 : i32
    %11 = vector.broadcast %c-1_i32 : i32 to vector<8x256xi32>
    %12 = arith.cmpi sge, %0, %11 : vector<8x256xi32>
    %c255_i32 = arith.constant 255 : i32
    %13 = vector.broadcast %c255_i32 : i32 to vector<8x256xi32>
    %14 = arith.cmpi slt, %0, %13 : vector<8x256xi32>
    %15 = arith.andi %12, %14 : vector<8x256xi1>
    %c-2_i32 = arith.constant -2 : i32
    %16 = vector.broadcast %c-2_i32 : i32 to vector<8x256xi32>
    %17 = arith.cmpi sge, %0, %16 : vector<8x256xi32>
    %c254_i32 = arith.constant 254 : i32
    %18 = vector.broadcast %c254_i32 : i32 to vector<8x256xi32>
    %19 = arith.cmpi slt, %0, %18 : vector<8x256xi32>
    %20 = arith.andi %17, %19 : vector<8x256xi1>
    %c0 = arith.constant 0 : index
    %c0_0 = arith.constant 0 : index
    %c0_1 = arith.constant 0 : index
    %21 = vector.load %arg1[%c0, %c0_0, %c0_1] : memref<1x8x256xf32, #tpu.memory_space<vmem>>, vector<1x8x256xf32>
    %22 = vector.shape_cast %21 : vector<1x8x256xf32> to vector<8x256xf32>
    %c2_i32_2 = arith.constant 2 : i32
    %23 = tpu.dynamic_rotate %22 by %c2_i32_2 dim 1 : vector<8x256xf32>, i32 -> vector<8x256xf32>
    %cst = arith.constant 0.000000e+00 : f32
    %24 = vector.broadcast %cst : f32 to vector<8x256xf32>
    %25 = arith.select %5, %23, %24 : vector<8x256xi1>, vector<8x256xf32>
    %c0_3 = arith.constant 0 : index
    %c0_4 = arith.constant 0 : index
    %26 = vector.load %arg5[%c0_3, %c0_4] : memref<40x256xf32, #tpu.memory_space<vmem>>, vector<8x256xf32>
    tpu.vector_store %arg5[%c0_3, %c0_4], %25 {strides = array<i32>} : memref<40x256xf32, #tpu.memory_space<vmem>>, vector<8x256xf32>,
    %c1_i32_5 = arith.constant 1 : i32
    %27 = tpu.dynamic_rotate %22 by %c1_i32_5 dim 1 : vector<8x256xf32>, i32 -> vector<8x256xf32>
    %cst_6 = arith.constant 0.000000e+00 : f32
    %28 = vector.broadcast %cst_6 : f32 to vector<8x256xf32>
    %29 = arith.select %10, %27, %28 : vector<8x256xi1>, vector<8x256xf32>
    %c8 = arith.constant 8 : index
    %c0_7 = arith.constant 0 : index
    %30 = vector.load %arg5[%c8, %c0_7] : memref<40x256xf32, #tpu.memory_space<vmem>>, vector<8x256xf32>
    tpu.vector_store %arg5[%c8, %c0_7], %29 {strides = array<i32>} : memref<40x256xf32, #tpu.memory_space<vmem>>, vector<8x256xf32>,
    %c16 = arith.constant 16 : index
    %c0_8 = arith.constant 0 : index
    %31 = vector.load %arg5[%c16, %c0_8] : memref<40x256xf32, #tpu.memory_space<vmem>>, vector<8x256xf32>
    tpu.vector_store %arg5[%c16, %c0_8], %22 {strides = array<i32>} : memref<40x256xf32, #tpu.memory_space<vmem>>, vector<8x256xf32>,
    %c255_i32_9 = arith.constant 255 : i32
    %32 = tpu.dynamic_rotate %22 by %c255_i32_9 dim 1 : vector<8x256xf32>, i32 -> vector<8x256xf32>
    %cst_10 = arith.constant 0.000000e+00 : f32
    %33 = vector.broadcast %cst_10 : f32 to vector<8x256xf32>
    %34 = arith.select %15, %32, %33 : vector<8x256xi1>, vector<8x256xf32>
    %c24 = arith.constant 24 : index
    %c0_11 = arith.constant 0 : index
    %35 = vector.load %arg5[%c24, %c0_11] : memref<40x256xf32, #tpu.memory_space<vmem>>, vector<8x256xf32>
    tpu.vector_store %arg5[%c24, %c0_11], %34 {strides = array<i32>} : memref<40x256xf32, #tpu.memory_space<vmem>>, vector<8x256xf32>,
    %c254_i32_12 = arith.constant 254 : i32
    %36 = tpu.dynamic_rotate %22 by %c254_i32_12 dim 1 : vector<8x256xf32>, i32 -> vector<8x256xf32>
    %cst_13 = arith.constant 0.000000e+00 : f32
    %37 = vector.broadcast %cst_13 : f32 to vector<8x256xf32>
    %38 = arith.select %20, %36, %37 : vector<8x256xi1>, vector<8x256xf32>
    %c32 = arith.constant 32 : index
    %c0_14 = arith.constant 0 : index
    %39 = vector.load %arg5[%c32, %c0_14] : memref<40x256xf32, #tpu.memory_space<vmem>>, vector<8x256xf32>
    tpu.vector_store %arg5[%c32, %c0_14], %38 {strides = array<i32>} : memref<40x256xf32, #tpu.memory_space<vmem>>, vector<8x256xf32>,
    %c0_15 = arith.constant 0 : index
    %c0_16 = arith.constant 0 : index
    %40 = vector.load %arg2[%c0_15, %c0_16] : memref<8x40xf32, #tpu.memory_space<vmem>>, vector<8x40xf32>
    %c0_17 = arith.constant 0 : index
    %c0_18 = arith.constant 0 : index
    %41 = vector.load %arg5[%c0_17, %c0_18] : memref<40x256xf32, #tpu.memory_space<vmem>>, vector<40x256xf32>
    %cst_19 = arith.constant dense<0.000000e+00> : vector<8x256xf32>
    %42 = tpu.matmul %40, %41, %cst_19 {dimension_numbers = #tpu.dot_dimension_numbers<[1], [0], [0], [1], [0, 0, 1, 1], [], []>} : vector<8x40xf32>, vector<40x256xf32>, vector<8x256xf32> -> vector<8x256xf32>
    %c0_20 = arith.constant 0 : index
    %c0_21 = arith.constant 0 : index
    %43 = vector.load %arg3[%c0_20, %c0_21] : memref<8x1xf32, #tpu.memory_space<vmem>>, vector<8x1xf32>
    %44 = vector.broadcast %43 : vector<8x1xf32> to vector<8x256xf32>
    %45 = arith.addf %42, %44 : vector<8x256xf32>
    %cst_22 = arith.constant 0.000000e+00 : f32
    %46 = vector.broadcast %cst_22 : f32 to vector<8x256xf32>
    %47 = arith.maximumf %45, %46 : vector<8x256xf32>
    %c0_23 = arith.constant 0 : index
    %c0_24 = arith.constant 0 : index
    %c0_25 = arith.constant 0 : index
    %48 = vector.load %arg4[%c0_23, %c0_24, %c0_25] : memref<1x8x256xf32, #tpu.memory_space<vmem>>, vector<1x8x256xf32>
    %49 = vector.shape_cast %48 : vector<1x8x256xf32> to vector<8x256xf32>
    %50 = vector.shape_cast %47 : vector<8x256xf32> to vector<1x8x256xf32>
    tpu.vector_store %arg4[%c0_23, %c0_24, %c0_25], %50 {strides = array<i32>} : memref<1x8x256xf32, #tpu.memory_space<vmem>>, vector<1x8x256xf32>,
    return
  }
  func.func @transform_0(%arg0: i32) -> (i32, i32, i32) {
    %c0_i32 = arith.constant 0 : i32
    %c0_i32_0 = arith.constant 0 : i32
    %c0_i32_1 = arith.constant 0 : i32
    return %arg0, %c0_i32, %c0_i32_0 : i32, i32, i32
  }
  func.func @transform_1(%arg0: i32) -> (i32, i32) {
    %c0_i32 = arith.constant 0 : i32
    %c0_i32_0 = arith.constant 0 : i32
    %c0_i32_1 = arith.constant 0 : i32
    return %c0_i32, %c0_i32_0 : i32, i32
  }
  func.func @transform_2(%arg0: i32) -> (i32, i32) {
    %c0_i32 = arith.constant 0 : i32
    %c0_i32_0 = arith.constant 0 : i32
    %c0_i32_1 = arith.constant 0 : i32
    return %c0_i32, %c0_i32_0 : i32, i32
  }
  func.func @transform_3(%arg0: i32) -> (i32, i32, i32) {
    %c0_i32 = arith.constant 0 : i32
    %c0_i32_0 = arith.constant 0 : i32
    %c0_i32_1 = arith.constant 0 : i32
    return %arg0, %c0_i32, %c0_i32_0 : i32, i32, i32
  }
}

</mosaic_0001>

<llo_original>
// kernel: tpu_custom_call.1
$region0: #{tpu_custom_call.1}
  #allocation0 [shape = 'u32[]', space=smem, size = 0x4, offset = 0x4, fixed_abs, tag = 'smem constant byte address 0x4 - core index']
  #allocation1 [shape = 'u32[144,128]{1,0:T(1,128)}', space=vmem, size = 0x12000, scoped, tag = 'internal scratch']
  #allocation2 [shape = 'f32[40,256]{1,0:T(8,128)}', space=vmem, size = 0xa000, scoped, tag = 'scratch operand']
  %s0 = inlined_call_operand.hbm [shape: f32[2,8,256], index: 0, kind: input, shape index: {}]
  %s1 = inlined_call_operand.vmem [shape: f32[8,40], index: 1, kind: input, shape index: {}]
  %s2 = inlined_call_operand.vmem [shape: f32[8,1], index: 2, kind: input, shape index: {}]
  %s3 = inlined_call_operand.hbm [shape: f32[2,8,256], index: 3, kind: output, shape index: {}]
  %s4 = sld [smem:[#allocation0]]
  $region49: #{tpu_custom_call.1} parent=0
    _
  %s6 = ssub.s32 1, %s4
  %s7 = scalar_select 0, %s6, %s4
  $region1: #{tpu_custom_call.1} parent=0
    #allocation3 [shape = 'u8[16384]{0}', space=vmem, size = 0x4000, scoped, tag = 'input window, operand 0']
    #allocation4 [shape = 's32[2]{0}', space=sflag, size = 0x8, scoped, tag = 'scoped memory for tpu_custom_call.1']
    #allocation5 [shape = 's32[2]{0}', space=sflag, size = 0x8, scoped, tag = 'scoped memory for tpu_custom_call.1']
    #allocation6 [shape = 'u8[16384]{0}', space=vmem, size = 0x4000, scoped, tag = 'output window, operand 0']
    %8 = vsyncpa [#allocation4], 0
    %s9 = scalar_lea.sflag [#allocation4], 1
    %10 = vsyncpa %s9, 0
    %11 = vsyncpa [#allocation5], 0
    %s12 = scalar_lea.sflag [#allocation5], 1
    %13 = vsyncpa %s12, 0
    loop: start=0, step=1, limit=4
    $region2: #{tpu_custom_call.1} parent=1 // loop_pre_header
      _
    $region3: #{tpu_custom_call.1} parent=1 // loop_header
      %s15 = sphi 0, %s19
      %p16 = scmp.ge.s32.totalorder %s15, 4
      %s25 = sphi 0, %s27
      %s28 = sphi 0, %s25
      %s29 = sphi 0, %s28
      %s45 = sphi 0, %s29
      %s49 = sphi 0, %s49
      %s51 = sphi 0, %s49
      %s52 = sphi 0, %s51
      %s66 = sphi 0, %s52
      %s70 = sphi 0, %s70
      %s72 = sphi 0, %s70
      %s73 = sphi 0, %s72
      %s87 = sphi 0, %s73
      %s93 = sphi 0, %s95
      %s96 = sphi 0, %s93
      %s97 = sphi 0, %s96
      %s113 = sphi 0, %s97
    $region4: #{tpu_custom_call.1} parent=1 // loop_header_branch
      %18 = sbr.rel (%p16) target = $region8
    $region5: #{tpu_custom_call.1} parent=1 // loop_body
      %s20 = ssub.s32 %s15, 1
      %s21 = ssub.s32 %s15, 2
      %s22 = sadd.s32 %s15, 1
      %s23 = ssub.s32 %s15, %s22
      %p24 = scmp.eq.s32.totalorder %s23, 0
      %s26 = sadd.s32 %s25, 1
      %s27 = scalar_select %p24, %s25, %s26
      %p30 = pneg %p24
      %p31 = scmp.eq.s32.totalorder %s15, 1
      %p32 = por %p30, %p31
      %p33 = scmp.ne.s32.totalorder %s25, %s28
      %p34 = scmp.eq.s32.totalorder %s15, 0
      %p35 = por %p33, %p34
      %p36 = scmp.ne.s32.totalorder %s25, %s28
      %p37 = scmp.eq.s32.totalorder %s20, 1
      %p38 = por %p36, %p37
      %p39 = scmp.ne.s32.totalorder %s28, %s29
      %p40 = scmp.eq.s32.totalorder %s20, 0
      %p41 = por %p39, %p40
      %p42 = scmp.ne.s32.totalorder %s28, %s29
      %p43 = scmp.eq.s32.totalorder %s21, 1
      %p44 = por %p42, %p43
      %p46 = scmp.ne.s32.totalorder %s29, %s45
      %p47 = scmp.eq.s32.totalorder %s21, 0
      %p48 = por %p46, %p47
      %s50 = sadd.s32 %s49, 1
      %p53 = scmp.eq.s32.totalorder %s15, 1
      %p54 = scmp.ne.s32.totalorder %s49, %s51
      %p55 = scmp.eq.s32.totalorder %s15, 0
      %p56 = por %p54, %p55
      %p57 = scmp.ne.s32.totalorder %s49, %s51
      %p58 = scmp.eq.s32.totalorder %s20, 1
      %p59 = por %p57, %p58
      %p60 = scmp.ne.s32.totalorder %s51, %s52
      %p61 = scmp.eq.s32.totalorder %s20, 0
      %p62 = por %p60, %p61
      %p63 = scmp.ne.s32.totalorder %s51, %s52
      %p64 = scmp.eq.s32.totalorder %s21, 1
      %p65 = por %p63, %p64
      %p67 = scmp.ne.s32.totalorder %s52, %s66
      %p68 = scmp.eq.s32.totalorder %s21, 0
      %p69 = por %p67, %p68
      %s71 = sadd.s32 %s70, 1
      %p74 = scmp.eq.s32.totalorder %s15, 1
      %p75 = scmp.ne.s32.totalorder %s70, %s72
      %p76 = scmp.eq.s32.totalorder %s15, 0
      %p77 = por %p75, %p76
      %p78 = scmp.ne.s32.totalorder %s70, %s72
      %p79 = scmp.eq.s32.totalorder %s20, 1
      %p80 = por %p78, %p79
      %p81 = scmp.ne.s32.totalorder %s72, %s73
      %p82 = scmp.eq.s32.totalorder %s20, 0
      %p83 = por %p81, %p82
      %p84 = scmp.ne.s32.totalorder %s72, %s73
      %p85 = scmp.eq.s32.totalorder %s21, 1
      %p86 = por %p84, %p85
      %p88 = scmp.ne.s32.totalorder %s73, %s87
      %p89 = scmp.eq.s32.totalorder %s21, 0
      %p90 = por %p88, %p89
      %s91 = ssub.s32 %s15, %s22
      %p92 = scmp.eq.s32.totalorder %s91, 0
      %s94 = sadd.s32 %s93, 1
      %s95 = scalar_select %p92, %s93, %s94
      %p98 = pneg %p92
      %p99 = scmp.eq.s32.totalorder %s15, 1
      %p100 = por %p98, %p99
      %p101 = scmp.ne.s32.totalorder %s93, %s96
      %p102 = scmp.eq.s32.totalorder %s15, 0
      %p103 = por %p101, %p102
      %p104 = scmp.ne.s32.totalorder %s93, %s96
      %p105 = scmp.eq.s32.totalorder %s20, 1
      %p106 = por %p104, %p105
      %p107 = scmp.ne.s32.totalorder %s96, %s97
      %p108 = scmp.eq.s32.totalorder %s20, 0
      %p109 = por %p107, %p108
      %p110 = scmp.ne.s32.totalorder %s96, %s97
      %p111 = scmp.eq.s32.totalorder %s21, 1
      %p112 = por %p110, %p111
      %p114 = scmp.ne.s32.totalorder %s97, %s113
      %p115 = scmp.eq.s32.totalorder %s21, 0
      %p116 = por %p114, %p115
      %p117 = scmp.le.s32.totalorder 1, %s15
      %p118 = scmp.lt.s32.totalorder %s15, 3
      %p119 = pnand %p117, %p118
      %p120 = pneg %p119
      // Predicated region
      $region9: #{tpu_custom_call.1} parent=5 // pred_check
        _
      $region10: #{tpu_custom_call.1} parent=5 // pred_check_branch
        %122 = sbr.rel (%p119) target = $region12
      $region11: #{tpu_custom_call.1} parent=5 // pred_region
        %s123 = ssub.s32 %s15, 1
        // Predicated region
        $region13: #{tpu_custom_call.1} parent=11 // pred_check
          %p124 = pneg %p62
        $region14: #{tpu_custom_call.1} parent=11 // pred_check_branch
          %126 = sbr.rel (%p124) target = $region16
        $region15: #{tpu_custom_call.1} parent=11 // pred_region
          _
        $region16: #{tpu_custom_call.1} parent=11 // pred_fallthru
          _
        // Predicated region
        $region17: #{tpu_custom_call.1} parent=11 // pred_check
          %p127 = pneg %p83
        $region18: #{tpu_custom_call.1} parent=11 // pred_check_branch
          %129 = sbr.rel (%p127) target = $region20
        $region19: #{tpu_custom_call.1} parent=11 // pred_region
          _
        $region20: #{tpu_custom_call.1} parent=11 // pred_fallthru
          _
      $region12: #{tpu_custom_call.1} parent=5 // pred_fallthru
        _
      %p130 = scmp.lt.s32.totalorder %s15, 2
      // Predicated region
      $region21: #{tpu_custom_call.1} parent=5 // pred_check
        %p131 = pneg %p130
      $region22: #{tpu_custom_call.1} parent=5 // pred_check_branch
        %133 = sbr.rel (%p131) target = $region24
      $region23: #{tpu_custom_call.1} parent=5 // pred_region
        // Predicated region
        $region25: #{tpu_custom_call.1} parent=23 // pred_check
          %p134 = pneg %p35
        $region26: #{tpu_custom_call.1} parent=23 // pred_check_branch
          %136 = sbr.rel (%p134) target = $region28
        $region27: #{tpu_custom_call.1} parent=23 // pred_region
          %s137 = sand.u32 %s25, 1
          %s138 = scalar_lea.sflag [#allocation4], %s137
          %s139 = sand.u32 %s25, 1
          %s140 = smul.addr %s139, 16
          %s141 = scalar_lea.vmem [#allocation3], %s140
          %s143 = ssub.s32 256, 256
          %144 = vsyncadd %s138, %s143
          %s145 = smul.addr %s15, 2
          %s146 = smul.addr %s145, 128
          %s147 = scalar_lea.hbm %s0, %s146
          %s149 = sshll.u32 %s141, 4
          %s150 = int_to_ptr.vmem [resolvable:$true] %s149
          %152 = dma.hbm_to_vmem [thread:$0]  %s147, 256, %s150, %s138
        $region28: #{tpu_custom_call.1} parent=23 // pred_fallthru
          _
      $region24: #{tpu_custom_call.1} parent=5 // pred_fallthru
        _
      %p153 = scmp.le.s32.totalorder 1, %s15
      %p154 = scmp.lt.s32.totalorder %s15, 3
      %p155 = pnand %p153, %p154
      %p156 = pneg %p155
      // Predicated region
      $region29: #{tpu_custom_call.1} parent=5 // pred_check
        _
      $region30: #{tpu_custom_call.1} parent=5 // pred_check_branch
        %158 = sbr.rel (%p155) target = $region32
      $region31: #{tpu_custom_call.1} parent=5 // pred_region
        %s159 = ssub.s32 %s15, 1
        %s160 = sand.u32 %s28, 1
        %s161 = scalar_lea.sflag [#allocation4], %s160
        %s162 = sand.u32 %s28, 1
        %s163 = smul.addr %s162, 16
        %s164 = scalar_lea.vmem [#allocation3], %s163
        // Predicated region
        $region33: #{tpu_custom_call.1} parent=31 // pred_check
          %p165 = pneg %p41
        $region34: #{tpu_custom_call.1} parent=31 // pred_check_branch
          %167 = sbr.rel (%p165) target = $region36
        $region35: #{tpu_custom_call.1} parent=31 // pred_region
          %168 = dma.done %s161, 256
        $region36: #{tpu_custom_call.1} parent=31 // pred_fallthru
          _
        %s169 = sand.u32 %s28, 1
        %s170 = scalar_lea.sflag [#allocation4], %s169
        %s171 = sand.u32 %s28, 1
        %s172 = smul.addr %s171, 16
        %s173 = scalar_lea.vmem [#allocation3], %s172
        %p174 = pneg %p41
        %p175 = pneg %p38
        %p176 = pneg %p62
        %p177 = pneg %p59
        %p178 = pneg %p83
        %p179 = pneg %p80
        %p180 = pneg %p109
        %p181 = pneg %p106
        %s182 = sand.u32 %s96, 1
        %s183 = scalar_lea.sflag [#allocation5], %s182
        %s184 = sand.u32 %s96, 1
        %s185 = smul.addr %s184, 16
        %s186 = scalar_lea.vmem [#allocation6], %s185
        %v187 = vlaneseq
        %v188 = vand.u32 %v187, 127
        %v189 = vadd.s32 %v188, 128
        %vm190 = vcmp.ge.s32.totalorder %v188, 2
        %vm191 = vcmp.ge.s32.totalorder %v189, 2
        %vm192 = vcmp.lt.s32.totalorder %v188, 258
        %vm193 = vcmp.lt.s32.totalorder %v189, 258
        %vm194 = vmand %vm190, %vm192
        %vm195 = vmand %vm191, %vm193
        %vm196 = vcmp.ge.s32.totalorder %v188, 1
        %vm197 = vcmp.ge.s32.totalorder %v189, 1
        %vm198 = vcmp.lt.s32.totalorder %v188, 257
        %vm199 = vcmp.lt.s32.totalorder %v189, 257
        %vm200 = vmand %vm196, %vm198
        %vm201 = vmand %vm197, %vm199
        %vm202 = vcmp.ge.s32.totalorder %v188, 4294967295
        %vm203 = vcmp.ge.s32.totalorder %v189, 4294967295
        %vm204 = vcmp.lt.s32.totalorder %v188, 255
        %vm205 = vcmp.lt.s32.totalorder %v189, 255
        %vm206 = vmand %vm202, %vm204
        %vm207 = vmand %vm203, %vm205
        %vm208 = vcmp.ge.s32.totalorder %v188, 4294967294
        %vm209 = vcmp.ge.s32.totalorder %v189, 4294967294
        %vm210 = vcmp.lt.s32.totalorder %v188, 254
        %vm211 = vcmp.lt.s32.totalorder %v189, 254
        %vm212 = vmand %vm208, %vm210
        %vm213 = vmand %vm209, %vm211
        %v214 = vld [vmem:[%s164] sm:$0xff]
        %v215 = vld [vmem:[%s164 + $0x8] sm:$0xff]
        %216 = vrot.lane.b32.xlu0 %v214, 2
        %v217 = vpop.permute.xlu0 %216
        %218 = vrot.lane.b32.xlu0 %v215, 2
        %v219 = vpop.permute.xlu0 %218
        %vm220 = vcmp.lt.s32.totalorder %v188, 2
        %v221 = vsel %vm220, %v217, %v219
        %v222 = vsel %vm220, %v219, %v217
        %v223 = vsel %vm194, %v222, 0.0
        %v224 = vsel %vm195, %v221, 0.0
        %225 = vst [vmem:[#allocation2] sm:$0xff] %v223
        %226 = vst [vmem:[#allocation2 + $0x8] sm:$0xff] %v224
        %227 = vrot.lane.b32.xlu0 %v214, 1
        %v228 = vpop.permute.xlu0 %227
        %229 = vrot.lane.b32.xlu0 %v215, 1
        %v230 = vpop.permute.xlu0 %229
        %vm231 = vcmp.lt.s32.totalorder %v188, 1
        %v232 = vsel %vm231, %v228, %v230
        %v233 = vsel %vm231, %v230, %v228
        %v234 = vsel %vm200, %v233, 0.0
        %v235 = vsel %vm201, %v232, 0.0
        %236 = vst [vmem:[#allocation2 + $0x10] sm:$0xff] %v234
        %237 = vst [vmem:[#allocation2 + $0x18] sm:$0xff] %v235
        %238 = vst [vmem:[#allocation2 + $0x20] sm:$0xff] %v214
        %239 = vst [vmem:[#allocation2 + $0x28] sm:$0xff] %v215
        %240 = vrot.lane.b32.xlu0 %v214, 127
        %v241 = vpop.permute.xlu0 %240
        %242 = vrot.lane.b32.xlu0 %v215, 127
        %v243 = vpop.permute.xlu0 %242
        %vm244 = vcmp.lt.s32.totalorder %v188, 127
        %v245 = vsel %vm244, %v241, %v243
        %v246 = vsel %vm244, %v243, %v241
        %v247 = vsel %vm206, %v245, 0.0
        %v248 = vsel %vm207, %v246, 0.0
        %249 = vst [vmem:[#allocation2 + $0x30] sm:$0xff] %v247
        %250 = vst [vmem:[#allocation2 + $0x38] sm:$0xff] %v248
        %251 = vrot.lane.b32.xlu0 %v214, 126
        %v252 = vpop.permute.xlu0 %251
        %253 = vrot.lane.b32.xlu0 %v215, 126
        %v254 = vpop.permute.xlu0 %253
        %vm255 = vcmp.lt.s32.totalorder %v188, 126
        %v256 = vsel %vm255, %v252, %v254
        %v257 = vsel %vm255, %v254, %v252
        %v258 = vsel %vm212, %v256, 0.0
        %v259 = vsel %vm213, %v257, 0.0
        %260 = vst [vmem:[#allocation2 + $0x40] sm:$0xff] %v258
        %261 = vst [vmem:[#allocation2 + $0x48] sm:$0xff] %v259
        %v262 = vld [vmem:[%s1] sm:$0xff]
        %v263 = vld [vmem:[#allocation2] sm:$0xff]
        %v264 = vld [vmem:[#allocation2 + $0x8] sm:$0xff]
        %v265 = vld [vmem:[#allocation2 + $0x10] sm:$0xff]
        %v266 = vld [vmem:[#allocation2 + $0x18] sm:$0xff]
        %v267 = vld [vmem:[#allocation2 + $0x20] sm:$0xff]
        %v268 = vld [vmem:[#allocation2 + $0x28] sm:$0xff]
        %v269 = vld [vmem:[#allocation2 + $0x30] sm:$0xff]
        %v270 = vld [vmem:[#allocation2 + $0x38] sm:$0xff]
        %v271 = vld [vmem:[#allocation2 + $0x40] sm:$0xff]
        %v272 = vld [vmem:[#allocation2 + $0x48] sm:$0xff]
        %v273 = vld [vmem:[%s2] sm:$0xff]
        %275 = vset.pattern.permute.xlu0 0
        %276 = vperm.xlu0 %275, %v273
        %v277 = vpop.permute.xlu0 %276
        %vm279 = vcmask 326656
        %v281 = vsel %vm279, %v262, 0
        %283 = vmatprep.subr.mxu0 %v264
        %284 = vmatpush1.msra.mxu0 %v263
        %285 = vmatprep.subr.mxu0 %v266
        %286 = vmatpush1.msra.mxu0 %v265
        %287 = vmatprep.subr.mxu0 %v268
        %288 = vmatpush1.msra.mxu0 %v267
        %289 = vmatprep.subr.mxu0 %v270
        %290 = vmatpush1.msra.mxu0 %v269
        %291 = vmatprep.subr.mxu0 %v272
        %292 = vmatpush1.msra.mxu0 %v271
        %293 = vmatprep.subr.mxu0 0.0
        %294 = vmatpush1.msra.mxu0 0.0
        %295 = vmatprep.subr.mxu0 0.0
        %296 = vmatpush1.msra.mxu0 0.0
        %297 = vmatprep.subr.mxu0 0.0
        %298 = vmatpush1.msra.mxu0 0.0
        %299 = vmatprep.subr.mxu0 0.0
        %300 = vmatpush1.msra.mxu0 0.0
        %301 = vmatprep.subr.mxu0 0.0
        %302 = vmatpush1.msra.mxu0 0.0
        %303 = vmatprep.subr.mxu0 0.0
        %304 = vmatpush1.msra.mxu0 0.0
        %305 = vmatprep.subr.mxu0 0.0
        %306 = vmatpush1.msra.mxu0 0.0
        %307 = vmatprep.subr.mxu0 0.0
        %308 = vmatpush1.msra.mxu0 0.0
        %309 = vmatprep.subr.mxu0 0.0
        %310 = vmatpush1.msra.mxu0 0.0
        %311 = vmatprep.subr.mxu0 0.0
        %312 = vmatpush1.msra.mxu0 0.0
        %313 = vmatprep.subr.mxu0 0.0
        %314 = vmatpush1.msra.mxu0 0.0
        %315 = vmatprep.subr.mxu0 0.0
        %316 = vmatpush1.msra.mxu0 0.0
        %317 = vmatprep.subr.mxu0 0.0
        %318 = vmatpush1.msra.mxu0 0.0
        %319 = vmatprep.subr.mxu0 0.0
        %320 = vmatpush1.msra.mxu0 0.0
        %321 = vmatprep.subr.mxu0 0.0
        %322 = vmatpush1.msra.mxu0 0.0
        %323 = vmatprep.subr.mxu0 0.0
        %324 = vmatpush1.msra.mxu0 0.0
        %325 = vmatprep.subr.mxu0 0.0
        %326 = vmatpush1.msra.mxu0 0.0
        %327 = vmatprep.subr.mxu0 0.0
        %328 = vmatpush1.msra.mxu0 0.0
        %329 = vmatprep.subr.mxu0 0.0
        %330 = vmatpush1.msra.mxu0 0.0
        %331 = vmatprep.subr.mxu0 0.0
        %332 = vmatpush1.msra.mxu0 0.0
        %333 = vmatprep.subr.mxu0 0.0
        %334 = vmatpush1.msra.mxu0 0.0
        %335 = vmatprep.subr.mxu0 0.0
        %336 = vmatpush1.msra.mxu0 0.0
        %337 = vmatprep.subr.mxu0 0.0
        %338 = vmatpush1.msra.mxu0 0.0
        %339 = vmatprep.subr.mxu0 0.0
        %340 = vmatpush1.msra.mxu0 0.0
        %341 = vmatprep.subr.mxu0 0.0
        %342 = vmatpush1.msra.mxu0 0.0
        %343 = vmatprep.subr.mxu0 0.0
        %344 = vmatpush1.msra.mxu0 0.0
        %345 = vmatprep.subr.mxu0 0.0
        %346 = vmatpush1.msra.mxu0 0.0
        %347 = vmatprep.mubr.f32.mxu0 0.0
        %348 = vmatmul.mubr.f32.gmra.mrb[0].mxu0 %v281
        %v349 = vpop.f32.mrb[0].mxu0
        %v350 = vadd.f32 %v277, %v349
        %v351 = vpop.f32.mrb[0].mxu0
        %v352 = vadd.f32 %v277, %v351
        %353 = vdwg.mxu0
        %v354 = vmax.f32 %v350, 0.0
        %v355 = vmax.f32 %v352, 0.0
        %356 = vst [vmem:[%s186] sm:$0xff] %v354
        %357 = vst [vmem:[%s186 + $0x8] sm:$0xff] %v355
        %s358 = sand.u32 %s96, 1
        %s359 = scalar_lea.sflag [#allocation5], %s358
        %s360 = sand.u32 %s96, 1
        %s361 = smul.addr %s360, 16
        %s362 = scalar_lea.vmem [#allocation6], %s361
        // Predicated region
        $region37: #{tpu_custom_call.1} parent=31 // pred_check
          %p363 = pneg %p106
        $region38: #{tpu_custom_call.1} parent=31 // pred_check_branch
          %365 = sbr.rel (%p363) target = $region40
        $region39: #{tpu_custom_call.1} parent=31 // pred_region
          %s367 = ssub.s32 256, 256
          %368 = vsyncadd %s359, %s367
          %s369 = smul.addr %s20, 2
          %s370 = smul.addr %s369, 128
          %s371 = scalar_lea.hbm %s3, %s370
          %s373 = sshll.u32 %s362, 4
          %s374 = int_to_ptr.vmem [resolvable:$true] %s373
          %376 = dma.vmem_to_hbm [thread:$0]  %s374, 256, %s371, %s359
        $region40: #{tpu_custom_call.1} parent=31 // pred_fallthru
          _
      $region32: #{tpu_custom_call.1} parent=5 // pred_fallthru
        _
      %p377 = scmp.le.s32.totalorder 2, %s15
      // Predicated region
      $region41: #{tpu_custom_call.1} parent=5 // pred_check
        %p378 = pneg %p377
      $region42: #{tpu_custom_call.1} parent=5 // pred_check_branch
        %380 = sbr.rel (%p378) target = $region44
      $region43: #{tpu_custom_call.1} parent=5 // pred_region
        %s381 = ssub.s32 %s15, 2
        // Predicated region
        $region45: #{tpu_custom_call.1} parent=43 // pred_check
          %p382 = pneg %p112
        $region46: #{tpu_custom_call.1} parent=43 // pred_check_branch
          %384 = sbr.rel (%p382) target = $region48
        $region47: #{tpu_custom_call.1} parent=43 // pred_region
          %s385 = sand.u32 %s97, 1
          %s386 = scalar_lea.sflag [#allocation5], %s385
          %s387 = sand.u32 %s97, 1
          %s388 = smul.addr %s387, 16
          %s389 = scalar_lea.vmem [#allocation6], %s388
          %390 = dma.done %s386, 256
        $region48: #{tpu_custom_call.1} parent=43 // pred_fallthru
          _
      $region44: #{tpu_custom_call.1} parent=5 // pred_fallthru
        _
    $region6: #{tpu_custom_call.1} parent=1 // loop_footer
      %s19 = sadd.s32 1, %s15
    $region7: #{tpu_custom_call.1} parent=1 // loop_footer_branch
      %14 = sbr.rel target = $region3
    $region8: #{tpu_custom_call.1} parent=1 // loop_exit
      _
    %391 = vsyncpa [#allocation4], 1
    %s392 = scalar_lea.sflag [#allocation4], 1
    %393 = vsyncpa %s392, 1
    %394 = vsyncpa [#allocation5], 1
    %s395 = scalar_lea.sflag [#allocation5], 1
    %396 = vsyncpa %s395, 1

</llo_original>
